<compile_context>
chip_gen: v6e
topology: v6e:2x2x1
jax: 0.10.0
libtpu: 0.0.40
codegen_flags: <defaults>
</compile_context>

<pallas_src>
import functools

import jax
import jax.numpy as jnp
from jax.experimental import pallas as pl
from jax.experimental.pallas import tpu as pltpu


def _round_up(x: int, m: int) -> int:
    return ((x + m - 1) // m) * m


def _sublane_min(dtype) -> int:
    # Minimum second-to-last block dim so tiles respect dtype sublane packing.
    return {4: 8, 2: 16, 1: 32}.get(jnp.dtype(dtype).itemsize, 8)


def _vmem_policy():
    """Returns (physical_cap_bytes, default_budget_bytes, default_tm_max) per chip gen."""
    cap = 0
    try:
        cap = int(getattr(pltpu.get_tpu_info(), "vmem_capacity_bytes", 0))
    except Exception:
        cap = 0
    if cap <= 0:
        cap = 64 << 20                      # conservative default (v7x per-TC size)
    if cap >= (96 << 20):                   # v5e / v6e: 128 MiB physical VMEM
        return cap, 96 << 20, 2048
    return cap, 44 << 20, 1024              # v7x: 64 MiB per TensorCore


def _resident_spec(block_shape, index_map):
    """BlockSpec for an operand that is never re-fetched: request single buffering."""
    if hasattr(pl, "Buffered"):
        try:
            return pl.BlockSpec(block_shape, index_map, pipeline_mode=pl.Buffered(1))
        except TypeError:  # older jax without pipeline_mode kwarg
            pass
    return pl.BlockSpec(block_shape, index_map)


def _pick_tiles(M, in_f, rank_p, out_f_pad, x_isz, w_isz, o_isz,
                budget, tm_max, tm_min, downcast):
    """Pick (TM, TN, working_set_bytes) so the pipelined working set fits `budget`."""

    def working_set(tm, tn):
        n_tiles = out_f_pad // tn
        n_b = 1 if n_tiles == 1 else 2                       # B/bias double-buffer only if streamed
        resident = (in_f * rank_p * w_isz                    # A: single-buffered resident
                    + n_b * (rank_p * tn * w_isz + tn * 4))  # B + f32 bias
        streamed = 2 * tm * (in_f * x_isz + tn * o_isz)      # double-buffered x and out tiles
        inter = tm * rank_p * 4 + tm * tn * 4                # f32 intermediates of both dots
        if downcast:
            inter += tm * rank_p * w_isz                     # bf16 recast of x@A
        return resident + streamed + inter

    tm_cap = min(tm_max, _round_up(max(M, 1), tm_min))
    tn = out_f_pad
    while True:
        tm = None
        for cand in (2048, 1024, 512, 256, 128, 64, 32, 16, 8):
            if cand > tm_cap or cand < tm_min:
                continue
            if working_set(cand, tn) <= budget:
                tm = cand
                break
        if tm is None:
            tm = tm_min
        # Prefer shrinking the N tile over dropping TM below ~256 rows.
        if tm >= 256 or tm >= tm_cap or tn <= 512 or tn % 256 != 0:
            return tm, tn, working_set(tm, tn)
        tn //= 2


def _svd_lowrank_kernel(x_ref, a_ref, b_ref, bias_ref, o_ref, *,
                        compute_dtype, downcast_intermediate):
    # Cast the streamed x tile in-kernel (VPU) -- no wrapper-side HBM pass over x.
    x = x_ref[...].astype(compute_dtype)
    xa = jnp.dot(x, a_ref[...], preferred_element_type=jnp.float32)        # (TM, rank_p) f32
    if downcast_intermediate:
        xa = xa.astype(compute_dtype)                                      # full-MXU-rate path
    out = jnp.dot(xa, b_ref[...], preferred_element_type=jnp.float32)      # (TM, TN) f32
    o_ref[...] = (out + bias_ref[...]).astype(o_ref.dtype)


def svd_lowrank_linear(x, matrix_A, matrix_B, bias=None, *,
                       compute_dtype=jnp.bfloat16, out_dtype=None,
                       downcast_intermediate=False,
                       vmem_budget_bytes=None, tm_max=None):
    """x: (M, in_features) -> (M, out_features).  output = x @ A @ B + bias.

    NOTE: compute_dtype=bfloat16 (default) runs the MXU operands in bf16 with f32
    accumulation; pass compute_dtype=jnp.float32 for exact parity with the f32 module.
    """
    M, in_f = x.shape
    assert matrix_A.shape[0] == in_f
    rank, out_f = matrix_B.shape
    assert matrix_A.shape[1] == rank
    if out_dtype is None:
        out_dtype = x.dtype
    if bias is None:
        bias = jnp.zeros((out_f,), dtype=jnp.float32)

    # --- lane-align rank and out_features (zero padding; numerics unchanged) ---
    rank_p = _round_up(rank, 128)
    out_f_pad = _round_up(out_f, 128)
    if rank_p != rank:
        matrix_A = jnp.pad(matrix_A, ((0, 0), (0, rank_p - rank)))
        matrix_B = jnp.pad(matrix_B, ((0, rank_p - rank), (0, 0)))
    if out_f_pad != out_f:
        matrix_B = jnp.pad(matrix_B, ((0, 0), (0, out_f_pad - out_f)))
        bias = jnp.pad(bias, (0, out_f_pad - out_f))

    # Weight operands in compute dtype (small, resident); bias stays f32; x untouched.
    a_c = matrix_A.astype(compute_dtype)
    b_c = matrix_B.astype(compute_dtype)
    bias2d = bias.reshape(1, out_f_pad).astype(jnp.float32)

    x_isz = jnp.dtype(x.dtype).itemsize
    w_isz = jnp.dtype(compute_dtype).itemsize
    o_isz = jnp.dtype(out_dtype).itemsize

    # --- per-generation VMEM policy and tile selection ---
    cap, default_budget, default_tm_max = _vmem_policy()
    budget = min(vmem_budget_bytes or default_budget, cap - (4 << 20))
    tm_max = tm_max or default_tm_max
    tm_min = max(_sublane_min(x.dtype), _sublane_min(out_dtype))
    tm, tn, ws = _pick_tiles(M, in_f, rank_p, out_f_pad, x_isz, w_isz, o_isz,
                             budget, tm_max, tm_min, downcast_intermediate)

    n_tiles = out_f_pad // tn
    grid = (pl.cdiv(M, tm), n_tiles)          # no M padding: boundary block is masked

    x_spec = pl.BlockSpec((tm, in_f), lambda i, j: (i, 0))
    a_spec = _resident_spec((in_f, rank_p), lambda i, j: (0, 0))
    if n_tiles == 1:
        b_spec = _resident_spec((rank_p, tn), lambda i, j: (0, j))
        bias_spec = _resident_spec((1, tn), lambda i, j: (0, j))
    else:
        b_spec = pl.BlockSpec((rank_p, tn), lambda i, j: (0, j))
        bias_spec = pl.BlockSpec((1, tn), lambda i, j: (0, j))
    out_spec = pl.BlockSpec((tm, tn), lambda i, j: (i, j))

    vmem_limit = int(min(max(ws + (4 << 20), 16 << 20), cap))

    cost = pl.CostEstimate(
        flops=2 * M * rank_p * (in_f + out_f_pad),
        transcendentals=0,
        bytes_accessed=(M * in_f * x_isz
                        + in_f * rank_p * w_isz
                        + rank_p * out_f_pad * w_isz
                        + out_f_pad * 4
                        + M * out_f_pad * o_isz),
    )

    kernel = functools.partial(_svd_lowrank_kernel,
                               compute_dtype=compute_dtype,
                               downcast_intermediate=downcast_intermediate)

    out = pl.pallas_call(
        kernel,
        out_shape=jax.ShapeDtypeStruct((M, out_f_pad), out_dtype),
        grid=grid,
        in_specs=[x_spec, a_spec, b_spec, bias_spec],
        out_specs=out_spec,
        compiler_params=pltpu.CompilerParams(
            dimension_semantics=("parallel", "parallel"),
            vmem_limit_bytes=vmem_limit,
        ),
        cost_estimate=cost,
    )(x, a_c, b_c, bias2d)

    if out_f_pad != out_f:
        out = out[:, :out_f]
    return out


def make_params(key, in_features, out_features, rank_ratio):
    """Deterministic SVD-based init mirroring SVDLowRankLinear.apply_svd_init (host glue)."""
    max_rank = min(in_features, out_features)
    rank = max(1, int(max_rank * rank_ratio))
    # original_weight has nn.Linear layout: (out_features, in_features)
    w = jax.random.normal(key, (out_features, in_features), dtype=jnp.float32) * 0.02
    wt = w.T  # (in_features, out_features)
    U, S, Vh = jnp.linalg.svd(wt, full_matrices=False)
    U_r = U[:, :rank]
    S_r = S[:rank]
    Vh_r = Vh[:rank, :]
    s_sqrt = jnp.sqrt(S_r)
    matrix_A = U_r * s_sqrt[None, :]          # (in_features, rank)
    matrix_B = s_sqrt[:, None] * Vh_r         # (rank, out_features)
    bias = jnp.zeros((out_features,), dtype=jnp.float32)
    return matrix_A.astype(jnp.float32), matrix_B.astype(jnp.float32), bias, rank


if __name__ == "__main__":
    key = jax.random.PRNGKey(0)
    k_w, k_x = jax.random.split(key)

    batch, seq = 2, 8
    in_features, out_features = 32, 32
    rank_ratio = 0.25  # -> rank = 8

    matrix_A, matrix_B, bias, rank = make_params(k_w, in_features, out_features, rank_ratio)

    x = jax.random.normal(k_x, (batch, seq, in_features), dtype=jnp.float32)
    x2d = x.reshape(batch * seq, in_features)  # flatten leading dims (glue)

    # Plain-JAX reference (module semantics).
    ref = x @ matrix_A @ matrix_B + bias

    # 1) f32-operand path: parity with the PyTorch module forward.
    out_f32 = svd_lowrank_linear(
        x2d, matrix_A, matrix_B, bias, compute_dtype=jnp.float32
    ).reshape(batch, seq, out_features)
    jax.block_until_ready(out_f32)
    assert jnp.allclose(out_f32, ref, atol=1e-4, rtol=1e-4), "f32 path mismatch vs reference"

    # 2) bf16-operand / f32-accumulate path (MXU-rate path recommended for v5e/v6e/v7x).
    out_bf16 = svd_lowrank_linear(
        x2d, matrix_A, matrix_B, bias, compute_dtype=jnp.bfloat16
    ).reshape(batch, seq, out_features)
    jax.block_until_ready(out_bf16)
    assert jnp.allclose(out_bf16, ref, atol=5e-3, rtol=5e-2), "bf16 path mismatch vs reference"

    print("KERNEL_OK")
</pallas_src>

<mosaic_0001>
module attributes {stable_mosaic.version = 11 : i64} {
  func.func @_svd_lowrank_kernel(%arg0: i32, %arg1: i32, %arg2: memref<16x32xf32, #tpu.memory_space<vmem>>, %arg3: memref<32x128xf32, #tpu.memory_space<vmem>>, %arg4: memref<128x128xf32, #tpu.memory_space<vmem>>, %arg5: memref<1x128xf32, #tpu.memory_space<vmem>>, %arg6: memref<16x128xf32, #tpu.memory_space<vmem>>) attributes {dimension_semantics = [#tpu.dimension_semantics<parallel>, #tpu.dimension_semantics<parallel>], iteration_bounds = array<i64: 1, 1>, scalar_prefetch = 0 : i64, scratch_operands = 0 : i64, tpu.core_type = #tpu.core_type<tc>, window_params = [{transform_indices = @transform_0, window_bounds = array<i64: 16, 32>}, {pipeline_mode = #tpu.pipeline_mode<synchronous>, transform_indices = @transform_1, window_bounds = array<i64: 32, 128>}, {pipeline_mode = #tpu.pipeline_mode<synchronous>, transform_indices = @transform_2, window_bounds = array<i64: 128, 128>}, {pipeline_mode = #tpu.pipeline_mode<synchronous>, transform_indices = @transform_3, window_bounds = array<i64: 1, 128>}, {transform_indices = @transform_4, window_bounds = array<i64: 16, 128>}]} {
    %c0 = arith.constant 0 : index
    %c0_0 = arith.constant 0 : index
    %0 = vector.load %arg2[%c0, %c0_0] : memref<16x32xf32, #tpu.memory_space<vmem>>, vector<16x32xf32>
    %c0_1 = arith.constant 0 : index
    %c0_2 = arith.constant 0 : index
    %1 = vector.load %arg3[%c0_1, %c0_2] : memref<32x128xf32, #tpu.memory_space<vmem>>, vector<32x128xf32>
    %cst = arith.constant dense<0.000000e+00> : vector<16x128xf32>
    %2 = tpu.matmul %0, %1, %cst {dimension_numbers = #tpu.dot_dimension_numbers<[1], [0], [0], [1], [0, 0, 1, 1], [], []>} : vector<16x32xf32>, vector<32x128xf32>, vector<16x128xf32> -> vector<16x128xf32>
    %c0_3 = arith.constant 0 : index
    %c0_4 = arith.constant 0 : index
    %3 = vector.load %arg4[%c0_3, %c0_4] : memref<128x128xf32, #tpu.memory_space<vmem>>, vector<128x128xf32>
    %cst_5 = arith.constant dense<0.000000e+00> : vector<16x128xf32>
    %4 = tpu.matmul %2, %3, %cst_5 {dimension_numbers = #tpu.dot_dimension_numbers<[1], [0], [0], [1], [0, 0, 1, 1], [], []>} : vector<16x128xf32>, vector<128x128xf32>, vector<16x128xf32> -> vector<16x128xf32>
    %c0_6 = arith.constant 0 : index
    %c0_7 = arith.constant 0 : index
    %5 = vector.load %arg5[%c0_6, %c0_7] : memref<1x128xf32, #tpu.memory_space<vmem>>, vector<1x128xf32>
    %6 = vector.broadcast %5 : vector<1x128xf32> to vector<16x128xf32>
    %7 = arith.addf %4, %6 : vector<16x128xf32>
    %c0_8 = arith.constant 0 : index
    %c0_9 = arith.constant 0 : index
    %8 = vector.load %arg6[%c0_8, %c0_9] : memref<16x128xf32, #tpu.memory_space<vmem>>, vector<16x128xf32>
    tpu.vector_store %arg6[%c0_8, %c0_9], %7 {strides = array<i32>} : memref<16x128xf32, #tpu.memory_space<vmem>>, vector<16x128xf32>,
    return
  }
  func.func @transform_0(%arg0: i32, %arg1: i32) -> (i32, i32) {
    %c0_i32 = arith.constant 0 : i32
    %c0_i32_0 = arith.constant 0 : i32
    return %arg0, %c0_i32 : i32, i32
  }
  func.func @transform_1(%arg0: i32, %arg1: i32) -> (i32, i32) {
    %c0_i32 = arith.constant 0 : i32
    %c0_i32_0 = arith.constant 0 : i32
    %c0_i32_1 = arith.constant 0 : i32
    return %c0_i32, %c0_i32_0 : i32, i32
  }
  func.func @transform_2(%arg0: i32, %arg1: i32) -> (i32, i32) {
    %c0_i32 = arith.constant 0 : i32
    %c0_i32_0 = arith.constant 0 : i32
    return %c0_i32, %arg1 : i32, i32
  }
  func.func @transform_3(%arg0: i32, %arg1: i32) -> (i32, i32) {
    %c0_i32 = arith.constant 0 : i32
    %c0_i32_0 = arith.constant 0 : i32
    return %c0_i32, %arg1 : i32, i32
  }
  func.func @transform_4(%arg0: i32, %arg1: i32) -> (i32, i32) {
    %c0_i32 = arith.constant 0 : i32
    return %arg0, %arg1 : i32, i32
  }
}

</mosaic_0001>

<llo_original>
// kernel: tpu_custom_call.1
$region0: #{tpu_custom_call.1}
  #allocation0 [shape = 'u32[]', space=smem, size = 0x4, offset = 0x4, fixed_abs, tag = 'smem constant byte address 0x4 - core index']
  #allocation1 [shape = 'u32[144,128]{1,0:T(1,128)}', space=vmem, size = 0x12000, scoped, tag = 'internal scratch']
  %s0 = inlined_call_operand.hbm [shape: f32[16,32], index: 0, kind: input, shape index: {}]
  %s1 = inlined_call_operand.hbm [shape: f32[32,128], index: 1, kind: input, shape index: {}]
  %s2 = inlined_call_operand.hbm [shape: f32[128,128], index: 2, kind: input, shape index: {}]
  %s3 = inlined_call_operand.vmem [shape: f32[1,128], index: 3, kind: input, shape index: {}]
  %s4 = inlined_call_operand.hbm [shape: f32[16,128], index: 4, kind: output, shape index: {}]
  %s5 = sld [smem:[#allocation0]]
  $region38: #{tpu_custom_call.1} parent=0
    _
  %s7 = ssub.s32 1, %s5
  %s8 = scalar_select 0, %s7, %s5
  $region1: #{tpu_custom_call.1} parent=0
    #allocation2 [shape = 'u8[8192]{0}', space=vmem, size = 0x2000, scoped, tag = 'input window, operand 0, single buffered']
    #allocation3 [shape = 's32[1]{0}', space=sflag, size = 0x4, scoped, tag = 'scoped memory for tpu_custom_call.1']
    #allocation4 [shape = 's32[1]{0}', space=sflag, size = 0x4, scoped, tag = 'scoped memory for tpu_custom_call.1']
    #allocation5 [shape = 'u8[16384]{0}', space=vmem, size = 0x4000, scoped, tag = 'input window, operand 1, single buffered']
    #allocation6 [shape = 's32[1]{0}', space=sflag, size = 0x4, scoped, tag = 'scoped memory for tpu_custom_call.1']
    #allocation7 [shape = 'u8[65536]{0}', space=vmem, size = 0x10000, scoped, tag = 'input window, operand 2, single buffered']
    #allocation8 [shape = 'u8[8192]{0}', space=vmem, size = 0x2000, scoped, tag = 'output window, operand 0, single buffered']
    %9 = vsyncpa [#allocation3], 0
    %10 = vsyncpa [#allocation6], 0
    %11 = vsyncpa [#allocation4], 0
    // Predicated region
    $region2: #{tpu_custom_call.1} parent=1 // pred_check
      _
    $region3: #{tpu_custom_call.1} parent=1 // pred_check_branch
      %13 = sbr.rel (0) target = $region5
    $region4: #{tpu_custom_call.1} parent=1 // pred_region
      %s15 = ssub.s32 256, 256
      %16 = vsyncadd [#allocation3], %s15
      %s17 = sshll.u32 [#allocation2], 4
      %s18 = int_to_ptr.vmem [resolvable:$true] %s17
      %23 = dma.hbm_to_vmem [thread:$0]  %s0, 256, %s18, [#allocation3], 128, 128, 8
    $region5: #{tpu_custom_call.1} parent=1 // pred_fallthru
      _
    // Predicated region
    $region6: #{tpu_custom_call.1} parent=1 // pred_check
      _
    $region7: #{tpu_custom_call.1} parent=1 // pred_check_branch
      %25 = sbr.rel (0) target = $region9
    $region8: #{tpu_custom_call.1} parent=1 // pred_region
      %s27 = ssub.s32 512, 512
      %28 = vsyncadd [#allocation6], %s27
      %s29 = sshll.u32 [#allocation5], 4
      %s30 = int_to_ptr.vmem [resolvable:$true] %s29
      %35 = dma.hbm_to_vmem [thread:$0]  %s1, 512, %s30, [#allocation6], 128, 128, 8
    $region9: #{tpu_custom_call.1} parent=1 // pred_fallthru
      _
    // Predicated region
    $region10: #{tpu_custom_call.1} parent=1 // pred_check
      _
    $region11: #{tpu_custom_call.1} parent=1 // pred_check_branch
      %37 = sbr.rel (0) target = $region13
    $region12: #{tpu_custom_call.1} parent=1 // pred_region
      %s39 = ssub.s32 2048, 2048
      %40 = vsyncadd [#allocation6], %s39
      %s41 = sshll.u32 [#allocation7], 4
      %s42 = int_to_ptr.vmem [resolvable:$true] %s41
      %47 = dma.hbm_to_vmem [thread:$0]  %s2, 2048, %s42, [#allocation6], 128, 128, 8
    $region13: #{tpu_custom_call.1} parent=1 // pred_fallthru
      _
    // Predicated region
    $region14: #{tpu_custom_call.1} parent=1 // pred_check
      _
    $region15: #{tpu_custom_call.1} parent=1 // pred_check_branch
      %49 = sbr.rel (0) target = $region17
    $region16: #{tpu_custom_call.1} parent=1 // pred_region
      _
    $region17: #{tpu_custom_call.1} parent=1 // pred_fallthru
      _
    // Predicated region
    $region18: #{tpu_custom_call.1} parent=1 // pred_check
      _
    $region19: #{tpu_custom_call.1} parent=1 // pred_check_branch
      %51 = sbr.rel (0) target = $region21
    $region20: #{tpu_custom_call.1} parent=1 // pred_region
      %52 = dma.done [#allocation3], 256
    $region21: #{tpu_custom_call.1} parent=1 // pred_fallthru
      _
    // Predicated region
    $region22: #{tpu_custom_call.1} parent=1 // pred_check
      _
    $region23: #{tpu_custom_call.1} parent=1 // pred_check_branch
      %54 = sbr.rel (0) target = $region25
    $region24: #{tpu_custom_call.1} parent=1 // pred_region
      %55 = dma.done [#allocation6], 512
    $region25: #{tpu_custom_call.1} parent=1 // pred_fallthru
      _
    // Predicated region
    $region26: #{tpu_custom_call.1} parent=1 // pred_check
      _
    $region27: #{tpu_custom_call.1} parent=1 // pred_check_branch
      %57 = sbr.rel (0) target = $region29
    $region28: #{tpu_custom_call.1} parent=1 // pred_region
      %58 = dma.done [#allocation6], 2048
    $region29: #{tpu_custom_call.1} parent=1 // pred_fallthru
      _
    %v59 = vld [vmem:[#allocation2] sm:$0xff]
    %v60 = vld [vmem:[#allocation2 + $0x8] sm:$0xff]
    %v61 = vld [vmem:[#allocation5] sm:$0xff]
    %v62 = vld [vmem:[#allocation5 + $0x8] sm:$0xff]
    %v63 = vld [vmem:[#allocation5 + $0x10] sm:$0xff]
    %v64 = vld [vmem:[#allocation5 + $0x18] sm:$0xff]
    %vm65 = vcmask 261120
    %v67 = vsel %vm65, %v59, 0
    %v70 = vsel %vm65, %v60, 0
    %72 = vmatprep.subr.mxu0 0.0
    %73 = vmatpush1.msra.mxu0 0.0
    %74 = vmatprep.subr.mxu0 0.0
    %75 = vmatpush1.msra.mxu0 0.0
    %76 = vmatprep.subr.mxu0 0.0
    %77 = vmatpush1.msra.mxu0 0.0
    %78 = vmatprep.subr.mxu0 0.0
    %79 = vmatpush1.msra.mxu0 0.0
    %80 = vmatprep.subr.mxu0 0.0
    %81 = vmatpush1.msra.mxu0 0.0
    %82 = vmatprep.subr.mxu0 0.0
    %83 = vmatpush1.msra.mxu0 0.0
    %84 = vmatprep.subr.mxu0 0.0
    %85 = vmatpush1.msra.mxu0 0.0
    %86 = vmatprep.subr.mxu0 0.0
    %87 = vmatpush1.msra.mxu0 0.0
    %88 = vmatprep.subr.mxu0 0.0
    %89 = vmatpush1.msra.mxu0 0.0
    %90 = vmatprep.subr.mxu0 0.0
    %91 = vmatpush1.msra.mxu0 0.0
    %92 = vmatprep.subr.mxu0 0.0
    %93 = vmatpush1.msra.mxu0 0.0
    %94 = vmatprep.subr.mxu0 0.0
    %95 = vmatpush1.msra.mxu0 0.0
    %96 = vmatprep.subr.mxu0 0.0
    %97 = vmatpush1.msra.mxu0 %v64
    %98 = vmatprep.subr.mxu0 0.0
    %99 = vmatpush1.msra.mxu0 %v63
    %100 = vmatprep.subr.mxu0 0.0
    %101 = vmatpush1.msra.mxu0 %v62
    %102 = vmatprep.subr.mxu0 0.0
    %103 = vmatpush1.msra.mxu0 %v61
    %104 = vmatprep.subr.mxu0 0.0
    %105 = vmatpush2.msra.mxu0 0.0
    %106 = vmatprep.subr.mxu0 0.0
    %107 = vmatpush2.msra.mxu0 0.0
    %108 = vmatprep.subr.mxu0 0.0
    %109 = vmatpush2.msra.mxu0 0.0
    %110 = vmatprep.subr.mxu0 0.0
    %111 = vmatpush2.msra.mxu0 0.0
    %112 = vmatprep.subr.mxu0 0.0
    %113 = vmatpush2.msra.mxu0 0.0
    %114 = vmatprep.subr.mxu0 0.0
    %115 = vmatpush2.msra.mxu0 0.0
    %116 = vmatprep.subr.mxu0 0.0
    %117 = vmatpush2.msra.mxu0 0.0
    %118 = vmatprep.subr.mxu0 0.0
    %119 = vmatpush2.msra.mxu0 0.0
    %120 = vmatprep.subr.mxu0 0.0
    %121 = vmatpush2.msra.mxu0 0.0
    %122 = vmatprep.subr.mxu0 0.0
    %123 = vmatpush2.msra.mxu0 0.0
    %124 = vmatprep.subr.mxu0 0.0
    %125 = vmatpush2.msra.mxu0 0.0
    %126 = vmatprep.subr.mxu0 0.0
    %127 = vmatpush2.msra.mxu0 0.0
    %128 = vmatprep.subr.mxu0 0.0
    %129 = vmatpush2.msra.mxu0 0.0
    %130 = vmatprep.subr.mxu0 0.0
    %131 = vmatpush2.msra.mxu0 0.0
    %132 = vmatprep.subr.mxu0 0.0
    %133 = vmatpush2.msra.mxu0 0.0
    %134 = vmatprep.subr.mxu0 0.0
    %135 = vmatpush2.msra.mxu0 0.0
    %136 = vmatprep.mubr.f32.mxu0 0.0
    %137 = vmatmul.mubr.f32.gmra.mxu0 %v67
    %v138 = vpop.f32.mrf.mxu0
    %v139 = vadd.f32 0.0, %v138
    %v140 = vpop.f32.mrf.mxu0
    %141 = vmatprep.mubr.f32.mxu0 0.0
    %142 = vmatmul.mubr.f32.gmra.mxu0 %v70
    %v143 = vpop.f32.mrf.mxu0
    %v144 = vadd.f32 0.0, %v143
    %v145 = vpop.f32.mrf.mxu0
    %146 = vdwg.mxu0
    %v147 = vld [vmem:[#allocation7] sm:$0xff]
    %v148 = vld [vmem:[#allocation7 + $0x8] sm:$0xff]
    %v149 = vld [vmem:[#allocation7 + $0x10] sm:$0xff]
    %v150 = vld [vmem:[#allocation7 + $0x18] sm:$0xff]
    %v151 = vld [vmem:[#allocation7 + $0x20] sm:$0xff]
    %v152 = vld [vmem:[#allocation7 + $0x28] sm:$0xff]
    %v153 = vld [vmem:[#allocation7 + $0x30] sm:$0xff]
    %v154 = vld [vmem:[#allocation7 + $0x38] sm:$0xff]
    %v155 = vld [vmem:[#allocation7 + $0x40] sm:$0xff]
    %v156 = vld [vmem:[#allocation7 + $0x48] sm:$0xff]
    %v157 = vld [vmem:[#allocation7 + $0x50] sm:$0xff]
    %v158 = vld [vmem:[#allocation7 + $0x58] sm:$0xff]
    %v159 = vld [vmem:[#allocation7 + $0x60] sm:$0xff]
    %v160 = vld [vmem:[#allocation7 + $0x68] sm:$0xff]
    %v161 = vld [vmem:[#allocation7 + $0x70] sm:$0xff]
    %v162 = vld [vmem:[#allocation7 + $0x78] sm:$0xff]
    %v163 = vld [vmem:[%s3] sm:$0x1]
    %v165 = vlaneseq
    %v166 = vshrl.u32 %v165, 7
    %v167 = vsub.s32 0, %v166
    %v168 = vrot.slane %v163, %v167
    %170 = vmatprep.subr.mxu0 0.0
    %171 = vmatpush1.msra.mxu0 %v162
    %172 = vmatprep.subr.mxu0 0.0
    %173 = vmatpush1.msra.mxu0 %v161
    %174 = vmatprep.subr.mxu0 0.0
    %175 = vmatpush1.msra.mxu0 %v160
    %176 = vmatprep.subr.mxu0 0.0
    %177 = vmatpush1.msra.mxu0 %v159
    %178 = vmatprep.subr.mxu0 0.0
    %179 = vmatpush1.msra.mxu0 %v158
    %180 = vmatprep.subr.mxu0 0.0
    %181 = vmatpush1.msra.mxu0 %v157
    %182 = vmatprep.subr.mxu0 0.0
    %183 = vmatpush1.msra.mxu0 %v156
    %184 = vmatprep.subr.mxu0 0.0
    %185 = vmatpush1.msra.mxu0 %v155
    %186 = vmatprep.subr.mxu0 0.0
    %187 = vmatpush1.msra.mxu0 %v154
    %188 = vmatprep.subr.mxu0 0.0
    %189 = vmatpush1.msra.mxu0 %v153
    %190 = vmatprep.subr.mxu0 0.0
    %191 = vmatpush1.msra.mxu0 %v152
    %192 = vmatprep.subr.mxu0 0.0
    %193 = vmatpush1.msra.mxu0 %v151
    %194 = vmatprep.subr.mxu0 0.0
    %195 = vmatpush1.msra.mxu0 %v150
    %196 = vmatprep.subr.mxu0 0.0
    %197 = vmatpush1.msra.mxu0 %v149
    %198 = vmatprep.subr.mxu0 0.0
    %199 = vmatpush1.msra.mxu0 %v148
    %200 = vmatprep.subr.mxu0 0.0
    %201 = vmatpush1.msra.mxu0 %v147
    %202 = vmatprep.subr.mxu0 0.0
    %203 = vmatpush2.msra.mxu0 0.0
    %204 = vmatprep.subr.mxu0 0.0
    %205 = vmatpush2.msra.mxu0 0.0
    %206 = vmatprep.subr.mxu0 0.0
    %207 = vmatpush2.msra.mxu0 0.0
    %208 = vmatprep.subr.mxu0 0.0
    %209 = vmatpush2.msra.mxu0 0.0
    %210 = vmatprep.subr.mxu0 0.0
    %211 = vmatpush2.msra.mxu0 0.0
    %212 = vmatprep.subr.mxu0 0.0
    %213 = vmatpush2.msra.mxu0 0.0
    %214 = vmatprep.subr.mxu0 0.0
    %215 = vmatpush2.msra.mxu0 0.0
    %216 = vmatprep.subr.mxu0 0.0
    %217 = vmatpush2.msra.mxu0 0.0
    %218 = vmatprep.subr.mxu0 0.0
    %219 = vmatpush2.msra.mxu0 0.0
    %220 = vmatprep.subr.mxu0 0.0
    %221 = vmatpush2.msra.mxu0 0.0
    %222 = vmatprep.subr.mxu0 0.0
    %223 = vmatpush2.msra.mxu0 0.0
    %224 = vmatprep.subr.mxu0 0.0
    %225 = vmatpush2.msra.mxu0 0.0
    %226 = vmatprep.subr.mxu0 0.0
    %227 = vmatpush2.msra.mxu0 0.0
    %228 = vmatprep.subr.mxu0 0.0
    %229 = vmatpush2.msra.mxu0 0.0
    %230 = vmatprep.subr.mxu0 0.0
    %231 = vmatpush2.msra.mxu0 0.0
    %232 = vmatprep.subr.mxu0 0.0
    %233 = vmatpush2.msra.mxu0 0.0
    %234 = vmatprep.mubr.f32.mxu0 0.0
    %235 = vmatmul.mubr.f32.gmra.mxu0 %v139
    %v236 = vpop.f32.mrf.mxu0
    %v237 = vadd.f32 %v168, %v236
    %v238 = vpop.f32.mrf.mxu0
    %239 = vmatprep.mubr.f32.mxu0 0.0
    %240 = vmatmul.mubr.f32.gmra.mxu0 %v144
    %v241 = vpop.f32.mrf.mxu0
    %v242 = vadd.f32 %v168, %v241
    %v243 = vpop.f32.mrf.mxu0
    %244 = vdwg.mxu0
    %245 = vst [vmem:[#allocation8] sm:$0xff] %v237
    %246 = vst [vmem:[#allocation8 + $0x8] sm:$0xff] %v242
    // Predicated region
    $region30: #{tpu_custom_call.1} parent=1 // pred_check
      _
    $region31: #{tpu_custom_call.1} parent=1 // pred_check_branch
      %248 = sbr.rel (0) target = $region33
    $region32: #{tpu_custom_call.1} parent=1 // pred_region
      %s250 = ssub.s32 256, 256
      %251 = vsyncadd [#allocation4], %s250
      %s252 = sshll.u32 [#allocation8], 4
      %s253 = int_to_ptr.vmem [resolvable:$true] %s252
      %258 = dma.vmem_to_hbm [thread:$0]  %s253, 256, %s4, [#allocation4], 128, 128, 8
    $region33: #{tpu_custom_call.1} parent=1 // pred_fallthru
      _
    // Predicated region
    $region34: #{tpu_custom_call.1} parent=1 // pred_check
      _
    $region35: #{tpu_custom_call.1} parent=1 // pred_check_branch
      %260 = sbr.rel (0) target = $region37
    $region36: #{tpu_custom_call.1} parent=1 // pred_region
      %261 = dma.done [#allocation4], 256
    $region37: #{tpu_custom_call.1} parent=1 // pred_fallthru
      _
    %262 = vsyncpa [#allocation3], 1
    %263 = vsyncpa [#allocation6], 1
    %264 = vsyncpa [#allocation4], 1

</llo_original>
